<compile_context>
chip_gen: v6e
topology: v6e:2x2x1
jax: 0.10.0
libtpu: 0.0.40
codegen_flags: <defaults>
</compile_context>

<pallas_src>
import functools

import jax
import jax.numpy as jnp
from jax.experimental import pallas as pl
from jax.experimental.pallas import tpu as pltpu


def _cb_weights(samples_per_cls, beta):
    """JAX port of timm's _cb_weights (tiny, runs as plain XLA)."""
    spc = jnp.asarray(samples_per_cls, dtype=jnp.float32)
    effective_n = 1.0 - jnp.power(jnp.float32(beta), spc)
    weights = (1.0 - beta) / (effective_n + 1e-8)
    return weights / jnp.sum(weights) * spc.shape[0]


def _round_up(x, m):
    return ((x + m - 1) // m) * m


def _cdiv(a, b):
    return -(-a // b)


def _choose_tiling(n, c, itemsize, user_tile_n):
    """Byte-driven, generation-aware tile sizing for the row (N) axis."""
    # Sublane multiple matching the packed vreg tiling of the logits dtype.
    sub = {4: 8, 2: 16, 1: 32}.get(itemsize, 8)

    # Generation-aware VMEM budget: 64 MiB scoped limit on 128 MiB parts
    # (v5e/v6e), 32 MiB on v7x (64 MiB physical VMEM).
    try:
        vmem_cap = int(pltpu.get_tpu_info().vmem_capacity_bytes)
    except Exception:  # be conservative if the query is unavailable
        vmem_cap = 64 * 1024 * 1024
    vmem_limit = (64 * 1024 * 1024 if vmem_cap >= 96 * 1024 * 1024
                  else 32 * 1024 * 1024)

    bytes_per_row = max(c * itemsize, 1)
    # Per-row VMEM footprint: 2x double-buffered logits tile + ~3 f32 temps.
    vmem_per_row = 2 * bytes_per_row + 3 * c * 4
    max_rows_vmem = max(sub, ((vmem_limit * 3 // 4) // vmem_per_row) // sub * sub)

    # HBM amortization target: ~4 MiB of logits per grid step (>=85% of the
    # HBM roofline per measured tiled-copy data; small tiles are ~30%).
    target_rows = max(sub, ((4 * 1024 * 1024) // bytes_per_row) // sub * sub)

    tile_n = min(target_rows, max_rows_vmem)
    if user_tile_n is not None:
        # User value is only an upper bound.
        tile_n = min(tile_n, max(_round_up(int(user_tile_n), sub), sub))

    # Megacore / pipelining: aim for >= ~8 grid steps whenever N allows so the
    # "parallel" axis actually spans both v7x TensorCores and the pipeline has
    # work to overlap.
    rows_for_steps = _round_up(max(_cdiv(n, 8), 1), sub)
    tile_n = min(tile_n, rows_for_steps)

    tile_n = max(sub, min(tile_n, _round_up(n, sub)))
    tile_n = _round_up(tile_n, sub)
    return tile_n, vmem_limit


def _cbce_kernel(n_rows, logits_ref, targets_ref, wt_ref, out_ref):
    logits = logits_ref[...].astype(jnp.float32)           # (TILE_N, C) f32
    tn, c = logits.shape

    # Validity mask for the ragged last tile (rows past N read garbage).
    row0 = pl.program_id(0) * tn
    row_idx = row0 + jax.lax.broadcasted_iota(jnp.int32, (tn, 1), 0)
    valid = row_idx < n_rows                                 # (TILE_N, 1)

    tgt = targets_ref[...]                                   # (TILE_N, 1) int32
    w_t = jnp.where(valid, wt_ref[...], 0.0)                 # (TILE_N, 1) f32

    # Numerically-stable logsumexp over the class (lane) axis.  The shifted
    # array is consumed directly by exp (not kept live for the target gather).
    row_max = jnp.max(logits, axis=1, keepdims=True)
    lse = jnp.log(jnp.sum(jnp.exp(logits - row_max), axis=1, keepdims=True))

    # One-hot "gather" of the raw target logit (no dynamic gather on TPU).
    cls_idx = jax.lax.broadcasted_iota(jnp.int32, (tn, c), 1)
    tgt_logit = jnp.sum(jnp.where(cls_idx == tgt, logits, 0.0),
                        axis=1, keepdims=True)               # (TILE_N, 1)

    log_pt = tgt_logit - row_max - lse
    # Mask invalid rows explicitly (their logits may be garbage / NaN).
    loss = jnp.where(valid, -w_t * log_pt, 0.0)

    loss_sum = jnp.sum(loss)
    w_sum = jnp.sum(w_t)

    # Lane-dense (8, 128) partials: sublane 0 carries the weighted-nll sum,
    # sublane 1 the weight sum (broadcast across lanes), rest zero.
    sub = jax.lax.broadcasted_iota(jnp.int32, (8, 128), 0)
    out_ref[...] = jnp.where(sub == 0, loss_sum,
                             jnp.where(sub == 1, w_sum, 0.0))


def cbce_loss(logits, targets, samples_per_cls, *, beta=0.999,
              reduction="mean", tile_n=None):
    """Pallas TPU implementation of timm CBCE.forward.

    logits:          (N, C) float array (f32 or bf16)
    targets:         (N,)   int array of class indices
    samples_per_cls: (C,)   per-class sample counts
    tile_n:          optional upper bound on the per-step row tile
    returns: scalar float32 loss
    """
    if reduction not in ("mean", "sum"):
        # TODO(synk): reduction='none' (per-sample vector output) not implemented.
        raise ValueError(f"unsupported reduction: {reduction}")

    n, c = logits.shape
    itemsize = jnp.dtype(logits.dtype).itemsize
    tile_rows, vmem_limit = _choose_tiling(n, c, itemsize, tile_n)
    g = _cdiv(n, tile_rows)

    # Class weights + wrapper-side per-row weight gather (N-length, negligible).
    w = _cb_weights(samples_per_cls, beta)                   # (C,) f32
    tgt_i = targets.astype(jnp.int32)
    in_range = (tgt_i >= 0) & (tgt_i < c)
    w_rows = jnp.where(in_range, w[jnp.clip(tgt_i, 0, c - 1)], 0.0)
    wt2d = w_rows.astype(jnp.float32).reshape(n, 1)
    targets2d = tgt_i.reshape(n, 1)

    cost = pl.CostEstimate(
        flops=int(8 * n * c),
        transcendentals=int(n * c),
        bytes_accessed=int(n * c * itemsize + n * 8 + g * 8 * 128 * 4),
    )

    kernel = functools.partial(_cbce_kernel, n)

    partials = pl.pallas_call(
        kernel,
        out_shape=jax.ShapeDtypeStruct((g * 8, 128), jnp.float32),
        grid=(g,),
        in_specs=[
            pl.BlockSpec((tile_rows, c), lambda i: (i, 0)),
            pl.BlockSpec((tile_rows, 1), lambda i: (i, 0)),
            pl.BlockSpec((tile_rows, 1), lambda i: (i, 0)),
        ],
        out_specs=pl.BlockSpec((8, 128), lambda i: (i, 0)),
        compiler_params=pltpu.CompilerParams(
            dimension_semantics=("parallel",),
            vmem_limit_bytes=vmem_limit,
        ),
        cost_estimate=cost,
    )(logits, targets2d, wt2d)

    partials = partials.reshape(g, 8, 128)
    loss_sum = jnp.sum(partials[:, 0, 0])
    w_sum = jnp.sum(partials[:, 1, 0])

    if reduction == "mean":
        return loss_sum / w_sum
    return loss_sum  # 'sum'


def _reference_cbce(logits, targets, samples_per_cls, beta=0.999,
                    reduction="mean"):
    """Pure-JAX reference matching F.cross_entropy(weight=w, reduction=...)."""
    w = _cb_weights(samples_per_cls, beta)
    logp = jax.nn.log_softmax(logits.astype(jnp.float32), axis=1)
    tgt = targets.astype(jnp.int32)
    log_pt = jnp.take_along_axis(logp, tgt[:, None], axis=1)[:, 0]
    w_t = w[tgt]
    loss = -w_t * log_pt
    if reduction == "mean":
        return jnp.sum(loss) / jnp.sum(w_t)
    return jnp.sum(loss)


if __name__ == "__main__":
    key = jax.random.PRNGKey(0)
    k_logits, k_targets, k_spc, k2_logits, k2_targets = jax.random.split(key, 5)

    # Small shape: single-tile path.
    N, C = 8, 32
    logits = jax.random.normal(k_logits, (N, C), dtype=jnp.float32)
    targets = jax.random.randint(k_targets, (N,), 0, C, dtype=jnp.int32)
    samples_per_cls = jax.random.randint(k_spc, (C,), 1, 100, dtype=jnp.int32)

    out = jax.block_until_ready(
        cbce_loss(logits, targets, samples_per_cls, beta=0.999, reduction="mean"))
    ref = _reference_cbce(logits, targets, samples_per_cls, beta=0.999,
                          reduction="mean")
    assert jnp.allclose(out, ref, atol=1e-5, rtol=1e-5), (out, ref)

    # Larger shape: multi-tile grid with a ragged (masked) final tile.
    N2, C2 = 200, 96
    logits2 = jax.random.normal(k2_logits, (N2, C2), dtype=jnp.float32)
    targets2 = jax.random.randint(k2_targets, (N2,), 0, C2, dtype=jnp.int32)
    spc2 = jax.random.randint(k_spc, (C2,), 1, 500, dtype=jnp.int32)

    out2 = jax.block_until_ready(
        cbce_loss(logits2, targets2, spc2, beta=0.999, reduction="mean"))
    ref2 = _reference_cbce(logits2, targets2, spc2, beta=0.999, reduction="mean")
    assert jnp.allclose(out2, ref2, atol=1e-5, rtol=1e-5), (out2, ref2)

    out3 = jax.block_until_ready(
        cbce_loss(logits2, targets2, spc2, reduction="sum"))
    ref3 = _reference_cbce(logits2, targets2, spc2, reduction="sum")
    assert jnp.allclose(out3, ref3, atol=1e-4, rtol=1e-5), (out3, ref3)

    # bf16 logits path (16-row sublane tiles; in-kernel f32 upcast).
    logits2_bf = logits2.astype(jnp.bfloat16)
    out4 = jax.block_until_ready(cbce_loss(logits2_bf, targets2, spc2))
    ref4 = _reference_cbce(logits2_bf.astype(jnp.float32), targets2, spc2)
    assert jnp.allclose(out4, ref4, atol=1e-4, rtol=1e-4), (out4, ref4)

    print("KERNEL_OK")
</pallas_src>

<mosaic_0001>
module attributes {stable_mosaic.version = 11 : i64} {
  func.func @_cbce_kernel(%arg0: i32, %arg1: memref<8x32xf32, #tpu.memory_space<vmem>>, %arg2: memref<8x1xi32, #tpu.memory_space<vmem>>, %arg3: memref<8x1xf32, #tpu.memory_space<vmem>>, %arg4: memref<8x128xf32, #tpu.memory_space<vmem>>) attributes {dimension_semantics = [#tpu.dimension_semantics<parallel>], iteration_bounds = array<i64: 1>, scalar_prefetch = 0 : i64, scratch_operands = 0 : i64, tpu.core_type = #tpu.core_type<tc>, window_params = [{transform_indices = @transform_0, window_bounds = array<i64: 8, 32>}, {transform_indices = @transform_1, window_bounds = array<i64: 8, 1>}, {transform_indices = @transform_2, window_bounds = array<i64: 8, 1>}, {transform_indices = @transform_3, window_bounds = array<i64: 8, 128>}]} {
    %c0 = arith.constant 0 : index
    %c0_0 = arith.constant 0 : index
    %0 = vector.load %arg1[%c0, %c0_0] : memref<8x32xf32, #tpu.memory_space<vmem>>, vector<8x32xf32>
    %c8_i32 = arith.constant 8 : i32
    %1 = arith.muli %arg0, %c8_i32 : i32
    %2 = tpu.iota {dimensions = array<i32: 0>} : vector<8x1xi32>
    %3 = vector.broadcast %1 : i32 to vector<8x1xi32>
    %4 = arith.addi %3, %2 : vector<8x1xi32>
    %c8_i32_1 = arith.constant 8 : i32
    %5 = vector.broadcast %c8_i32_1 : i32 to vector<8x1xi32>
    %6 = arith.cmpi slt, %4, %5 : vector<8x1xi32>
    %c0_2 = arith.constant 0 : index
    %c0_3 = arith.constant 0 : index
    %7 = vector.load %arg2[%c0_2, %c0_3] : memref<8x1xi32, #tpu.memory_space<vmem>>, vector<8x1xi32>
    %c0_4 = arith.constant 0 : index
    %c0_5 = arith.constant 0 : index
    %8 = vector.load %arg3[%c0_4, %c0_5] : memref<8x1xf32, #tpu.memory_space<vmem>>, vector<8x1xf32>
    %cst = arith.constant 0.000000e+00 : f32
    %9 = vector.broadcast %cst : f32 to vector<8x1xf32>
    %10 = arith.select %6, %8, %9 : vector<8x1xi1>, vector<8x1xf32>
    %cst_6 = arith.constant dense<0xFF800000> : vector<8xf32>
    %11 = vector.multi_reduction <maximumf>, %0, %cst_6 [1] : vector<8x32xf32> to vector<8xf32>
    %12 = vector.shape_cast %11 : vector<8xf32> to vector<8x1xf32>
    %13 = vector.broadcast %12 : vector<8x1xf32> to vector<8x32xf32>
    %14 = arith.subf %0, %13 : vector<8x32xf32>
    %15 = math.exp %14 : vector<8x32xf32>
    %cst_7 = arith.constant dense<0.000000e+00> : vector<8xf32>
    %16 = vector.multi_reduction <add>, %15, %cst_7 [1] : vector<8x32xf32> to vector<8xf32>
    %17 = vector.shape_cast %16 : vector<8xf32> to vector<8x1xf32>
    %18 = math.log %17 : vector<8x1xf32>
    %19 = tpu.iota {dimensions = array<i32: 1>} : vector<8x32xi32>
    %20 = vector.broadcast %7 : vector<8x1xi32> to vector<8x32xi32>
    %21 = arith.cmpi eq, %19, %20 : vector<8x32xi32>
    %cst_8 = arith.constant 0.000000e+00 : f32
    %22 = vector.broadcast %cst_8 : f32 to vector<8x32xf32>
    %23 = arith.select %21, %0, %22 : vector<8x32xi1>, vector<8x32xf32>
    %cst_9 = arith.constant dense<0.000000e+00> : vector<8xf32>
    %24 = vector.multi_reduction <add>, %23, %cst_9 [1] : vector<8x32xf32> to vector<8xf32>
    %25 = vector.shape_cast %24 : vector<8xf32> to vector<8x1xf32>
    %26 = arith.subf %25, %12 : vector<8x1xf32>
    %27 = arith.subf %26, %18 : vector<8x1xf32>
    %cst_10 = arith.constant 0.000000e+00 : f32
    %28 = vector.broadcast %cst_10 : f32 to vector<8x1xf32>
    %29 = arith.subf %28, %10 : vector<8x1xf32>
    %30 = arith.mulf %29, %27 : vector<8x1xf32>
    %cst_11 = arith.constant 0.000000e+00 : f32
    %31 = vector.broadcast %cst_11 : f32 to vector<8x1xf32>
    %32 = arith.select %6, %30, %31 : vector<8x1xi1>, vector<8x1xf32>
    %33 = vector.shape_cast %32 : vector<8x1xf32> to vector<1x8x1xf32>
    %cst_12 = arith.constant dense<0.000000e+00> : vector<1xf32>
    %34 = vector.multi_reduction <add>, %33, %cst_12 [1, 2] : vector<1x8x1xf32> to vector<1xf32>
    %35 = vector.shape_cast %34 : vector<1xf32> to vector<1x1x1xf32>
    %36 = vector.extract %35[0, 0, 0] : f32 from vector<1x1x1xf32>
    %37 = vector.shape_cast %10 : vector<8x1xf32> to vector<1x8x1xf32>
    %cst_13 = arith.constant dense<0.000000e+00> : vector<1xf32>
    %38 = vector.multi_reduction <add>, %37, %cst_13 [1, 2] : vector<1x8x1xf32> to vector<1xf32>
    %39 = vector.shape_cast %38 : vector<1xf32> to vector<1x1x1xf32>
    %40 = vector.extract %39[0, 0, 0] : f32 from vector<1x1x1xf32>
    %41 = tpu.iota {dimensions = array<i32: 0>} : vector<8x128xi32>
    %c0_i32 = arith.constant 0 : i32
    %42 = vector.broadcast %c0_i32 : i32 to vector<8x128xi32>
    %43 = arith.cmpi eq, %41, %42 : vector<8x128xi32>
    %c1_i32 = arith.constant 1 : i32
    %44 = vector.broadcast %c1_i32 : i32 to vector<8x128xi32>
    %45 = arith.cmpi eq, %41, %44 : vector<8x128xi32>
    %cst_14 = arith.constant 0.000000e+00 : f32
    %46 = vector.broadcast %40 : f32 to vector<8x128xf32>
    %47 = vector.broadcast %cst_14 : f32 to vector<8x128xf32>
    %48 = arith.select %45, %46, %47 : vector<8x128xi1>, vector<8x128xf32>
    %49 = vector.broadcast %36 : f32 to vector<8x128xf32>
    %50 = arith.select %43, %49, %48 : vector<8x128xi1>, vector<8x128xf32>
    %c0_15 = arith.constant 0 : index
    %c0_16 = arith.constant 0 : index
    %51 = vector.load %arg4[%c0_15, %c0_16] : memref<8x128xf32, #tpu.memory_space<vmem>>, vector<8x128xf32>
    tpu.vector_store %arg4[%c0_15, %c0_16], %50 {strides = array<i32>} : memref<8x128xf32, #tpu.memory_space<vmem>>, vector<8x128xf32>,
    return
  }
  func.func @transform_0(%arg0: i32) -> (i32, i32) {
    %c0_i32 = arith.constant 0 : i32
    %c0_i32_0 = arith.constant 0 : i32
    return %arg0, %c0_i32 : i32, i32
  }
  func.func @transform_1(%arg0: i32) -> (i32, i32) {
    %c0_i32 = arith.constant 0 : i32
    %c0_i32_0 = arith.constant 0 : i32
    return %arg0, %c0_i32 : i32, i32
  }
  func.func @transform_2(%arg0: i32) -> (i32, i32) {
    %c0_i32 = arith.constant 0 : i32
    %c0_i32_0 = arith.constant 0 : i32
    return %arg0, %c0_i32 : i32, i32
  }
  func.func @transform_3(%arg0: i32) -> (i32, i32) {
    %c0_i32 = arith.constant 0 : i32
    %c0_i32_0 = arith.constant 0 : i32
    return %arg0, %c0_i32 : i32, i32
  }
}

</mosaic_0001>

<llo_original>
// kernel: tpu_custom_call.1
$region0: #{tpu_custom_call.1}
  #allocation0 [shape = 'u32[]', space=smem, size = 0x4, offset = 0x4, fixed_abs, tag = 'smem constant byte address 0x4 - core index']
  #allocation1 [shape = 'u32[144,128]{1,0:T(1,128)}', space=vmem, size = 0x12000, scoped, tag = 'internal scratch']
  %s0 = inlined_call_operand.vmem [shape: f32[8,32], index: 0, kind: input, shape index: {}]
  %s1 = inlined_call_operand.vmem [shape: s32[8,1], index: 1, kind: input, shape index: {}]
  %s2 = inlined_call_operand.vmem [shape: f32[8,1], index: 2, kind: input, shape index: {}]
  %s3 = inlined_call_operand.hbm [shape: f32[8,128], index: 3, kind: output, shape index: {}]
  %s4 = sld [smem:[#allocation0]]
  $region22: #{tpu_custom_call.1} parent=0
    _
  %s6 = ssub.s32 1, %s4
  %s7 = scalar_select 0, %s6, %s4
  $region1: #{tpu_custom_call.1} parent=0
    #allocation2 [shape = 'u8[4096]{0}', space=vmem, size = 0x1000, scoped, tag = 'output window, operand 0, single buffered']
    #allocation3 [shape = 's32[1]{0}', space=sflag, size = 0x4, scoped, tag = 'scoped memory for tpu_custom_call.1']
    %8 = vsyncpa [#allocation3], 0
    // Predicated region
    $region2: #{tpu_custom_call.1} parent=1 // pred_check
      _
    $region3: #{tpu_custom_call.1} parent=1 // pred_check_branch
      %10 = sbr.rel (0) target = $region5
    $region4: #{tpu_custom_call.1} parent=1 // pred_region
      _
    $region5: #{tpu_custom_call.1} parent=1 // pred_fallthru
      _
    // Predicated region
    $region6: #{tpu_custom_call.1} parent=1 // pred_check
      _
    $region7: #{tpu_custom_call.1} parent=1 // pred_check_branch
      %12 = sbr.rel (0) target = $region9
    $region8: #{tpu_custom_call.1} parent=1 // pred_region
      _
    $region9: #{tpu_custom_call.1} parent=1 // pred_fallthru
      _
    // Predicated region
    $region10: #{tpu_custom_call.1} parent=1 // pred_check
      _
    $region11: #{tpu_custom_call.1} parent=1 // pred_check_branch
      %14 = sbr.rel (0) target = $region13
    $region12: #{tpu_custom_call.1} parent=1 // pred_region
      _
    $region13: #{tpu_custom_call.1} parent=1 // pred_fallthru
      _
    %v15 = vld [vmem:[%s0] sm:$0xff]
    %s16 = smul.u32 0, 8
    %v17 = vlaneseq
    %v18 = vshrl.u32 %v17, 7
    %v19 = vstv %s16
    %v20 = vadd.s32 %v19, %v18
    %vm21 = vcmp.lt.s32.totalorder %v20, 8
    %v22 = vld [vmem:[%s1] sm:$0xff]
    %v23 = vld [vmem:[%s2] sm:$0xff]
    %v24 = vsel %vm21, %v23, 0.0
    %vm25 = vcmask 261120
    %v26 = vsel %vm25, %v15, -inf
    %27 = vmax.xlane.f32.xlu0 %v26
    %v28 = vpop.xlane.xlu0 %27
    %v29 = vsub.f32 %v15, %v28
    %v30 = vmul.f32 %v29, 1.442695
    %v31 = vpow.pop %v30
    %v32 = vsel %vm25, %v31, 0.0
    %33 = vadd.xlane.f32.xlu0 %v32
    %v34 = vpop.xlane.xlu0 %33
    %v35 = vlog2.pop %v34
    %v36 = vmul.f32 %v35, 0.6931472
    %v37 = vlaneseq
    %v38 = vand.u32 %v37, 127
    %39 = vset.pattern.permute.xlu0 0
    %40 = vperm.xlu0 %39, %v22
    %v41 = vpop.permute.xlu0 %40
    %vm42 = vcmp.eq.s32.totalorder %v38, %v41
    %v43 = vsel %vm42, %v15, 0.0
    %v44 = vsel %vm25, %v43, 0.0
    %45 = vadd.xlane.f32.xlu0 %v44
    %v46 = vpop.xlane.xlu0 %45
    %v47 = vsub.f32 %v46, %v28
    %v48 = vsub.f32 %v47, %v36
    %v49 = vsub.f32 0.0, %v24
    %v50 = vmul.f32 %v49, %v48
    %v51 = vsel %vm21, %v50, 0.0
    %vm52 = vcmask 7168
    %v53 = vsel %vm52, %v51, 0.0
    %54 = vadd.xlane.f32.xlu0 %v53
    %v55 = vpop.xlane.xlu0 %54
    %v56 = vrot.slane %v55, 4
    %v57 = vadd.f32 %v55, %v56
    %v58 = vrot.slane %v57, 2
    %v59 = vadd.f32 %v57, %v58
    %v60 = vrot.slane %v59, 1
    %v61 = vadd.f32 %v59, %v60
    %s62 = vtos %v61
    %v63 = vsel %vm52, %v24, 0.0
    %64 = vadd.xlane.f32.xlu0 %v63
    %v65 = vpop.xlane.xlu0 %64
    %v66 = vrot.slane %v65, 4
    %v67 = vadd.f32 %v65, %v66
    %v68 = vrot.slane %v67, 2
    %v69 = vadd.f32 %v67, %v68
    %v70 = vrot.slane %v69, 1
    %v71 = vadd.f32 %v69, %v70
    %s72 = vtos %v71
    %vm73 = vcmp.eq.s32.totalorder %v18, 0
    %vm74 = vcmp.eq.s32.totalorder %v18, 1
    %v75 = vstv %s72
    %v76 = vsel %vm74, %v75, 0.0
    %v77 = vstv %s62
    %v78 = vsel %vm73, %v77, %v76
    %79 = vst [vmem:[#allocation2] sm:$0xff] %v78
    // Predicated region
    $region14: #{tpu_custom_call.1} parent=1 // pred_check
      _
    $region15: #{tpu_custom_call.1} parent=1 // pred_check_branch
      %81 = sbr.rel (0) target = $region17
    $region16: #{tpu_custom_call.1} parent=1 // pred_region
      %s83 = ssub.s32 128, 128
      %84 = vsyncadd [#allocation3], %s83
      %s86 = sshll.u32 [#allocation2], 4
      %s87 = int_to_ptr.vmem [resolvable:$true] %s86
      %89 = dma.vmem_to_hbm [thread:$0]  %s87, 128, %s3, [#allocation3]
    $region17: #{tpu_custom_call.1} parent=1 // pred_fallthru
      _
    // Predicated region
    $region18: #{tpu_custom_call.1} parent=1 // pred_check
      _
    $region19: #{tpu_custom_call.1} parent=1 // pred_check_branch
      %91 = sbr.rel (0) target = $region21
    $region20: #{tpu_custom_call.1} parent=1 // pred_region
      %92 = dma.done [#allocation3], 128
    $region21: #{tpu_custom_call.1} parent=1 // pred_fallthru
      _
    %93 = vsyncpa [#allocation3], 1

</llo_original>
